<compile_context>
chip_gen: v7x
topology: tpu7x:2x2x1
jax: 0.10.0
libtpu: 0.0.40
codegen_flags: <defaults>
</compile_context>

<pallas_src>
import functools

import jax
import jax.numpy as jnp
from jax import lax
from jax.experimental import pallas as pl
from jax.experimental.pallas import tpu as pltpu

BN_EPS = 1e-5


def _fc1_stats_kernel(x_ref, w1_ref, b1_ref, h_ref, part_ref):
    """fc1 for one batch tile + per-tile partial BN statistics (sum, sum of squares)."""
    x = x_ref[...].astype(jnp.bfloat16)                      # (tb, in_f) bf16 for MXU
    # x @ W1^T with W1 in its native (hidden, in_f) layout: contract dim 1 of both.
    h = lax.dot_general(
        x, w1_ref[...],
        dimension_numbers=(((1,), (1,)), ((), ())),
        preferred_element_type=jnp.float32,
    )
    h = h + b1_ref[...]                                      # f32 bias add
    h_ref[...] = h                                           # f32 pre-BN activation

    # Single sweep for both statistics; packed into an (8, hidden) sublane-aligned block.
    s = jnp.sum(h, axis=0, keepdims=True)                    # (1, hidden)
    ss = jnp.sum(h * h, axis=0, keepdims=True)               # (1, hidden)
    hidden = h.shape[1]
    row = lax.broadcasted_iota(jnp.int32, (8, hidden), 0)
    part = jnp.where(
        row == 0,
        jnp.broadcast_to(s, (8, hidden)),
        jnp.where(row == 1, jnp.broadcast_to(ss, (8, hidden)), 0.0),
    )
    part_ref[...] = part


def _bn_relu_fc2_kernel(h_ref, stats_ref, gamma_ref, beta_ref, w2_ref, b2_ref, o_ref,
                        *, inv_n, eps):
    """Fused BatchNorm (folded scale/shift) + ReLU + fc2 for one batch tile."""
    h = h_ref[...]                                           # (tb, hidden) f32
    st = stats_ref[...]                                      # (2, hidden) f32
    mean = st[0:1, :] * inv_n                                # E[h]
    ex2 = st[1:2, :] * inv_n                                 # E[h^2]
    var = ex2 - mean * mean                                  # biased batch variance
    scale = gamma_ref[...] * lax.rsqrt(var + eps)            # gamma / sqrt(var+eps)
    shift = beta_ref[...] - mean * scale
    a = jnp.maximum(h * scale + shift, 0.0).astype(jnp.bfloat16)

    # a @ W2^T with W2 in its native (out_f, hidden) layout.
    out = lax.dot_general(
        a, w2_ref[...],
        dimension_numbers=(((1,), (1,)), ((), ())),
        preferred_element_type=jnp.float32,
    )
    o_ref[...] = out + b2_ref[...]


def mlp_forward(x, w1, b1, gamma, beta, w2, b2, *, batch_tile=128):
    B, in_f = x.shape
    hidden = w1.shape[0]
    out_f = w2.shape[0]

    tb = min(batch_tile, B)
    assert B % tb == 0, "batch must divide evenly into batch tiles"
    num_tiles = B // tb

    # One-time dtype prep (no transposes; weights consumed in native layout).
    w1_bf = w1.astype(jnp.bfloat16)                          # (hidden, in_f)
    w2_bf = w2.astype(jnp.bfloat16)                          # (out_f, hidden)
    b1_r = b1.reshape(1, hidden).astype(jnp.float32)
    b2_r = b2.reshape(1, out_f).astype(jnp.float32)
    g_r = gamma.reshape(1, hidden).astype(jnp.float32)
    be_r = beta.reshape(1, hidden).astype(jnp.float32)

    parallel = pltpu.CompilerParams(dimension_semantics=("parallel",))

    # ---- Pass 1: fc1 + per-tile partial BN statistics -------------------------------
    h, partials = pl.pallas_call(
        _fc1_stats_kernel,
        out_shape=(
            jax.ShapeDtypeStruct((B, hidden), jnp.float32),
            jax.ShapeDtypeStruct((num_tiles * 8, hidden), jnp.float32),
        ),
        grid=(num_tiles,),
        in_specs=[
            pl.BlockSpec((tb, in_f), lambda i: (i, 0)),       # x tile
            pl.BlockSpec((hidden, in_f), lambda i: (0, 0)),   # W1 (pinned)
            pl.BlockSpec((1, hidden), lambda i: (0, 0)),      # b1 (pinned)
        ],
        out_specs=(
            pl.BlockSpec((tb, hidden), lambda i: (i, 0)),     # pre-BN activation
            pl.BlockSpec((8, hidden), lambda i: (i, 0)),      # per-tile partial stats
        ),
        compiler_params=parallel,
    )(x, w1_bf, b1_r)

    # Tiny cross-tile combine => full-batch sum / sum-of-squares (rows 0 and 1).
    stats = partials.reshape(num_tiles, 8, hidden)[:, :2, :].sum(axis=0)  # (2, hidden)

    # ---- Pass 2: fused BN + ReLU + fc2 -----------------------------------------------
    kernel2 = functools.partial(_bn_relu_fc2_kernel, inv_n=1.0 / B, eps=BN_EPS)
    out = pl.pallas_call(
        kernel2,
        out_shape=jax.ShapeDtypeStruct((B, out_f), jnp.float32),
        grid=(num_tiles,),
        in_specs=[
            pl.BlockSpec((tb, hidden), lambda i: (i, 0)),     # h tile
            pl.BlockSpec((2, hidden), lambda i: (0, 0)),      # combined stats (pinned)
            pl.BlockSpec((1, hidden), lambda i: (0, 0)),      # gamma (pinned)
            pl.BlockSpec((1, hidden), lambda i: (0, 0)),      # beta (pinned)
            pl.BlockSpec((out_f, hidden), lambda i: (0, 0)),  # W2 (pinned)
            pl.BlockSpec((1, out_f), lambda i: (0, 0)),       # b2 (pinned)
        ],
        out_specs=pl.BlockSpec((tb, out_f), lambda i: (i, 0)),
        compiler_params=parallel,
    )(h, stats, g_r, be_r, w2_bf, b2_r)
    return out


def mlp_reference(x, w1, b1, gamma, beta, w2, b2):
    h = x @ w1.T + b1
    mean = jnp.mean(h, axis=0, keepdims=True)
    var = jnp.mean((h - mean) ** 2, axis=0, keepdims=True)
    h = (h - mean) / jnp.sqrt(var + BN_EPS) * gamma + beta
    h = jnp.maximum(h, 0.0)
    return h @ w2.T + b2


if __name__ == "__main__":
    # Small but lane/MXU-aligned shapes (128-multiples), per the performance review.
    B, in_features, hidden_features, out_features = 256, 128, 256, 128

    key = jax.random.PRNGKey(0)
    k_x, k_w1, k_b1, k_g, k_be, k_w2, k_b2 = jax.random.split(key, 7)

    x = jax.random.normal(k_x, (B, in_features), dtype=jnp.float32)
    w1 = jax.random.normal(k_w1, (hidden_features, in_features), dtype=jnp.float32) * 0.1
    b1 = jax.random.normal(k_b1, (hidden_features,), dtype=jnp.float32) * 0.1
    gamma = 1.0 + 0.1 * jax.random.normal(k_g, (hidden_features,), dtype=jnp.float32)
    beta = 0.1 * jax.random.normal(k_be, (hidden_features,), dtype=jnp.float32)
    w2 = jax.random.normal(k_w2, (out_features, hidden_features), dtype=jnp.float32) * 0.1
    b2 = jax.random.normal(k_b2, (out_features,), dtype=jnp.float32) * 0.1

    out = mlp_forward(x, w1, b1, gamma, beta, w2, b2)
    out = jax.block_until_ready(out)

    ref = mlp_reference(x, w1, b1, gamma, beta, w2, b2)
    assert out.shape == (B, out_features)
    # bf16 matmul inputs with f32 accumulation => slightly looser tolerance vs f32 ref.
    assert jnp.allclose(out, ref, atol=1e-1, rtol=5e-2), "mismatch vs reference"

    print("KERNEL_OK")
</pallas_src>

<mosaic_0001>
module attributes {stable_mosaic.version = 11 : i64} {
  func.func @_fc1_stats_kernel(%arg0: i32, %arg1: memref<128x128xf32, #tpu.memory_space<vmem>>, %arg2: memref<256x128xbf16, #tpu.memory_space<vmem>>, %arg3: memref<1x256xf32, #tpu.memory_space<vmem>>, %arg4: memref<128x256xf32, #tpu.memory_space<vmem>>, %arg5: memref<8x256xf32, #tpu.memory_space<vmem>>) attributes {dimension_semantics = [#tpu.dimension_semantics<parallel>], iteration_bounds = array<i64: 2>, scalar_prefetch = 0 : i64, scratch_operands = 0 : i64, tpu.core_type = #tpu.core_type<tc>, window_params = [{transform_indices = @transform_0, window_bounds = array<i64: 128, 128>}, {pipeline_mode = #tpu.pipeline_mode<synchronous>, transform_indices = @transform_1, window_bounds = array<i64: 256, 128>}, {pipeline_mode = #tpu.pipeline_mode<synchronous>, transform_indices = @transform_2, window_bounds = array<i64: 1, 256>}, {transform_indices = @transform_3, window_bounds = array<i64: 128, 256>}, {transform_indices = @transform_4, window_bounds = array<i64: 8, 256>}]} {
    %c0 = arith.constant 0 : index
    %c0_0 = arith.constant 0 : index
    %0 = vector.load %arg1[%c0, %c0_0] : memref<128x128xf32, #tpu.memory_space<vmem>>, vector<128x128xf32>
    %1 = arith.truncf %0 : vector<128x128xf32> to vector<128x128xbf16>
    %c0_1 = arith.constant 0 : index
    %c0_2 = arith.constant 0 : index
    %2 = vector.load %arg2[%c0_1, %c0_2] : memref<256x128xbf16, #tpu.memory_space<vmem>>, vector<256x128xbf16>
    %cst = arith.constant dense<0.000000e+00> : vector<128x256xf32>
    %3 = tpu.matmul %1, %2, %cst {dimension_numbers = #tpu.dot_dimension_numbers<[1], [1], [0], [0], [0, 0, 1, 0], [], []>} : vector<128x128xbf16>, vector<256x128xbf16>, vector<128x256xf32> -> vector<128x256xf32>
    %c0_3 = arith.constant 0 : index
    %c0_4 = arith.constant 0 : index
    %4 = vector.load %arg3[%c0_3, %c0_4] : memref<1x256xf32, #tpu.memory_space<vmem>>, vector<1x256xf32>
    %5 = vector.broadcast %4 : vector<1x256xf32> to vector<128x256xf32>
    %6 = arith.addf %3, %5 : vector<128x256xf32>
    %c0_5 = arith.constant 0 : index
    %c0_6 = arith.constant 0 : index
    %7 = vector.load %arg4[%c0_5, %c0_6] : memref<128x256xf32, #tpu.memory_space<vmem>>, vector<128x256xf32>
    tpu.vector_store %arg4[%c0_5, %c0_6], %6 {strides = array<i32>} : memref<128x256xf32, #tpu.memory_space<vmem>>, vector<128x256xf32>,
    %cst_7 = arith.constant dense<0.000000e+00> : vector<256xf32>
    %8 = vector.multi_reduction <add>, %6, %cst_7 [0] : vector<128x256xf32> to vector<256xf32>
    %9 = vector.shape_cast %8 : vector<256xf32> to vector<1x256xf32>
    %10 = arith.mulf %6, %6 : vector<128x256xf32>
    %cst_8 = arith.constant dense<0.000000e+00> : vector<256xf32>
    %11 = vector.multi_reduction <add>, %10, %cst_8 [0] : vector<128x256xf32> to vector<256xf32>
    %12 = vector.shape_cast %11 : vector<256xf32> to vector<1x256xf32>
    %13 = tpu.iota {dimensions = array<i32: 0>} : vector<8x256xi32>
    %c0_i32 = arith.constant 0 : i32
    %14 = vector.broadcast %c0_i32 : i32 to vector<8x256xi32>
    %15 = arith.cmpi eq, %13, %14 : vector<8x256xi32>
    %16 = vector.shape_cast %9 : vector<1x256xf32> to vector<1x256xf32>
    %17 = vector.broadcast %16 : vector<1x256xf32> to vector<8x256xf32>
    %c1_i32 = arith.constant 1 : i32
    %18 = vector.broadcast %c1_i32 : i32 to vector<8x256xi32>
    %19 = arith.cmpi eq, %13, %18 : vector<8x256xi32>
    %20 = vector.shape_cast %12 : vector<1x256xf32> to vector<1x256xf32>
    %21 = vector.broadcast %20 : vector<1x256xf32> to vector<8x256xf32>
    %cst_9 = arith.constant 0.000000e+00 : f32
    %22 = vector.broadcast %cst_9 : f32 to vector<8x256xf32>
    %23 = arith.select %19, %21, %22 : vector<8x256xi1>, vector<8x256xf32>
    %24 = arith.select %15, %17, %23 : vector<8x256xi1>, vector<8x256xf32>
    %c0_10 = arith.constant 0 : index
    %c0_11 = arith.constant 0 : index
    %25 = vector.load %arg5[%c0_10, %c0_11] : memref<8x256xf32, #tpu.memory_space<vmem>>, vector<8x256xf32>
    tpu.vector_store %arg5[%c0_10, %c0_11], %24 {strides = array<i32>} : memref<8x256xf32, #tpu.memory_space<vmem>>, vector<8x256xf32>,
    return
  }
  func.func @transform_0(%arg0: i32) -> (i32, i32) {
    %c0_i32 = arith.constant 0 : i32
    %c0_i32_0 = arith.constant 0 : i32
    return %arg0, %c0_i32 : i32, i32
  }
  func.func @transform_1(%arg0: i32) -> (i32, i32) {
    %c0_i32 = arith.constant 0 : i32
    %c0_i32_0 = arith.constant 0 : i32
    %c0_i32_1 = arith.constant 0 : i32
    return %c0_i32, %c0_i32_0 : i32, i32
  }
  func.func @transform_2(%arg0: i32) -> (i32, i32) {
    %c0_i32 = arith.constant 0 : i32
    %c0_i32_0 = arith.constant 0 : i32
    %c0_i32_1 = arith.constant 0 : i32
    return %c0_i32, %c0_i32_0 : i32, i32
  }
  func.func @transform_3(%arg0: i32) -> (i32, i32) {
    %c0_i32 = arith.constant 0 : i32
    %c0_i32_0 = arith.constant 0 : i32
    return %arg0, %c0_i32 : i32, i32
  }
  func.func @transform_4(%arg0: i32) -> (i32, i32) {
    %c0_i32 = arith.constant 0 : i32
    %c0_i32_0 = arith.constant 0 : i32
    return %arg0, %c0_i32 : i32, i32
  }
}

</mosaic_0001>

<llo_original>
// kernel: tpu_custom_call.1
$region0: #{tpu_custom_call.1}
  #allocation0 [shape = 'u32[]', space=smem, size = 0x4, offset = 0x4, fixed_abs, tag = 'smem constant byte address 0x4 - core index']
  #allocation1 [shape = 'u32[144,128]{1,0:T(1,128)}', space=vmem, size = 0x12000, scoped, tag = 'internal scratch']
  %s0 = inlined_call_operand.hbm [shape: f32[256,128], index: 0, kind: input, shape index: {}]
  %s1 = inlined_call_operand.hbm [shape: bf16[256,128], index: 1, kind: input, shape index: {}]
  %s2 = inlined_call_operand.vmem [shape: f32[1,256], index: 2, kind: input, shape index: {}]
  %s3 = inlined_call_operand.hbm [shape: f32[256,256], index: 3, kind: output, shape index: {0}]
  %s4 = inlined_call_operand.hbm [shape: f32[16,256], index: 4, kind: output, shape index: {1}]
  %5 = xla_tuple %s3, %s4
  %s6 = sld [smem:[#allocation0]]
  $region61: #{tpu_custom_call.1} parent=0
    _
  %s8 = ssub.s32 1, %s6
  %s9 = scalar_select 0, %s8, %s6
  $region1: #{tpu_custom_call.1} parent=0
    #allocation2 [shape = 'u8[131072]{0}', space=vmem, size = 0x20000, scoped, tag = 'input window, operand 0']
    #allocation3 [shape = 's32[2]{0}', space=sflag, size = 0x8, scoped, tag = 'scoped memory for tpu_custom_call.1']
    #allocation4 [shape = 's32[2]{0}', space=sflag, size = 0x8, scoped, tag = 'scoped memory for tpu_custom_call.1']
    #allocation5 [shape = 'u8[65536]{0}', space=vmem, size = 0x10000, scoped, tag = 'input window, operand 1, single buffered']
    #allocation6 [shape = 's32[1]{0}', space=sflag, size = 0x4, scoped, tag = 'scoped memory for tpu_custom_call.1']
    #allocation7 [shape = 'u8[262144]{0}', space=vmem, size = 0x40000, scoped, tag = 'output window, operand 0']
    #allocation8 [shape = 'u8[16384]{0}', space=vmem, size = 0x4000, scoped, tag = 'output window, operand 1']
    #allocation9 [shape = 's32[2]{0}', space=sflag, size = 0x8, scoped, tag = 'scoped memory for tpu_custom_call.1']
    %10 = vsyncpa [#allocation3], 0
    %s11 = scalar_lea.sflag [#allocation3], 1
    %12 = vsyncpa %s11, 0
    %13 = vsyncpa [#allocation6], 0
    %14 = vsyncpa [#allocation4], 0
    %s15 = scalar_lea.sflag [#allocation4], 1
    %16 = vsyncpa %s15, 0
    %17 = vsyncpa [#allocation9], 0
    %s18 = scalar_lea.sflag [#allocation9], 1
    %19 = vsyncpa %s18, 0
    loop: start=0, step=1, limit=4
    $region2: #{tpu_custom_call.1} parent=1 // loop_pre_header
      _
    $region3: #{tpu_custom_call.1} parent=1 // loop_header
      %s21 = sphi 0, %s25
      %p22 = scmp.ge.s32.totalorder %s21, 4
      %s31 = sphi 0, %s33
      %s34 = sphi 0, %s31
      %s35 = sphi 0, %s34
      %s51 = sphi 0, %s35
      %s55 = sphi 0, %s55
      %s57 = sphi 0, %s55
      %s58 = sphi 0, %s57
      %s72 = sphi 0, %s58
      %s76 = sphi 0, %s76
      %s78 = sphi 0, %s76
      %s79 = sphi 0, %s78
      %s93 = sphi 0, %s79
      %s99 = sphi 0, %s101
      %s102 = sphi 0, %s99
      %s103 = sphi 0, %s102
      %s119 = sphi 0, %s103
      %s125 = sphi 0, %s127
      %s128 = sphi 0, %s125
      %s129 = sphi 0, %s128
      %s145 = sphi 0, %s129
    $region4: #{tpu_custom_call.1} parent=1 // loop_header_branch
      %24 = sbr.rel (%p22) target = $region8
    $region5: #{tpu_custom_call.1} parent=1 // loop_body
      %s26 = ssub.s32 %s21, 1
      %s27 = ssub.s32 %s21, 2
      %s28 = sadd.s32 %s21, 1
      %s29 = ssub.s32 %s21, %s28
      %p30 = scmp.eq.s32.totalorder %s29, 0
      %s32 = sadd.s32 %s31, 1
      %s33 = scalar_select %p30, %s31, %s32
      %p36 = pneg %p30
      %p37 = scmp.eq.s32.totalorder %s21, 1
      %p38 = por %p36, %p37
      %p39 = scmp.ne.s32.totalorder %s31, %s34
      %p40 = scmp.eq.s32.totalorder %s21, 0
      %p41 = por %p39, %p40
      %p42 = scmp.ne.s32.totalorder %s31, %s34
      %p43 = scmp.eq.s32.totalorder %s26, 1
      %p44 = por %p42, %p43
      %p45 = scmp.ne.s32.totalorder %s34, %s35
      %p46 = scmp.eq.s32.totalorder %s26, 0
      %p47 = por %p45, %p46
      %p48 = scmp.ne.s32.totalorder %s34, %s35
      %p49 = scmp.eq.s32.totalorder %s27, 1
      %p50 = por %p48, %p49
      %p52 = scmp.ne.s32.totalorder %s35, %s51
      %p53 = scmp.eq.s32.totalorder %s27, 0
      %p54 = por %p52, %p53
      %s56 = sadd.s32 %s55, 1
      %p59 = scmp.eq.s32.totalorder %s21, 1
      %p60 = scmp.ne.s32.totalorder %s55, %s57
      %p61 = scmp.eq.s32.totalorder %s21, 0
      %p62 = por %p60, %p61
      %p63 = scmp.ne.s32.totalorder %s55, %s57
      %p64 = scmp.eq.s32.totalorder %s26, 1
      %p65 = por %p63, %p64
      %p66 = scmp.ne.s32.totalorder %s57, %s58
      %p67 = scmp.eq.s32.totalorder %s26, 0
      %p68 = por %p66, %p67
      %p69 = scmp.ne.s32.totalorder %s57, %s58
      %p70 = scmp.eq.s32.totalorder %s27, 1
      %p71 = por %p69, %p70
      %p73 = scmp.ne.s32.totalorder %s58, %s72
      %p74 = scmp.eq.s32.totalorder %s27, 0
      %p75 = por %p73, %p74
      %s77 = sadd.s32 %s76, 1
      %p80 = scmp.eq.s32.totalorder %s21, 1
      %p81 = scmp.ne.s32.totalorder %s76, %s78
      %p82 = scmp.eq.s32.totalorder %s21, 0
      %p83 = por %p81, %p82
      %p84 = scmp.ne.s32.totalorder %s76, %s78
      %p85 = scmp.eq.s32.totalorder %s26, 1
      %p86 = por %p84, %p85
      %p87 = scmp.ne.s32.totalorder %s78, %s79
      %p88 = scmp.eq.s32.totalorder %s26, 0
      %p89 = por %p87, %p88
      %p90 = scmp.ne.s32.totalorder %s78, %s79
      %p91 = scmp.eq.s32.totalorder %s27, 1
      %p92 = por %p90, %p91
      %p94 = scmp.ne.s32.totalorder %s79, %s93
      %p95 = scmp.eq.s32.totalorder %s27, 0
      %p96 = por %p94, %p95
      %s97 = ssub.s32 %s21, %s28
      %p98 = scmp.eq.s32.totalorder %s97, 0
      %s100 = sadd.s32 %s99, 1
      %s101 = scalar_select %p98, %s99, %s100
      %p104 = pneg %p98
      %p105 = scmp.eq.s32.totalorder %s21, 1
      %p106 = por %p104, %p105
      %p107 = scmp.ne.s32.totalorder %s99, %s102
      %p108 = scmp.eq.s32.totalorder %s21, 0
      %p109 = por %p107, %p108
      %p110 = scmp.ne.s32.totalorder %s99, %s102
      %p111 = scmp.eq.s32.totalorder %s26, 1
      %p112 = por %p110, %p111
      %p113 = scmp.ne.s32.totalorder %s102, %s103
      %p114 = scmp.eq.s32.totalorder %s26, 0
      %p115 = por %p113, %p114
      %p116 = scmp.ne.s32.totalorder %s102, %s103
      %p117 = scmp.eq.s32.totalorder %s27, 1
      %p118 = por %p116, %p117
      %p120 = scmp.ne.s32.totalorder %s103, %s119
      %p121 = scmp.eq.s32.totalorder %s27, 0
      %p122 = por %p120, %p121
      %s123 = ssub.s32 %s21, %s28
      %p124 = scmp.eq.s32.totalorder %s123, 0
      %s126 = sadd.s32 %s125, 1
      %s127 = scalar_select %p124, %s125, %s126
      %p130 = pneg %p124
      %p131 = scmp.eq.s32.totalorder %s21, 1
      %p132 = por %p130, %p131
      %p133 = scmp.ne.s32.totalorder %s125, %s128
      %p134 = scmp.eq.s32.totalorder %s21, 0
      %p135 = por %p133, %p134
      %p136 = scmp.ne.s32.totalorder %s125, %s128
      %p137 = scmp.eq.s32.totalorder %s26, 1
      %p138 = por %p136, %p137
      %p139 = scmp.ne.s32.totalorder %s128, %s129
      %p140 = scmp.eq.s32.totalorder %s26, 0
      %p141 = por %p139, %p140
      %p142 = scmp.ne.s32.totalorder %s128, %s129
      %p143 = scmp.eq.s32.totalorder %s27, 1
      %p144 = por %p142, %p143
      %p146 = scmp.ne.s32.totalorder %s129, %s145
      %p147 = scmp.eq.s32.totalorder %s27, 0
      %p148 = por %p146, %p147
      %p149 = scmp.le.s32.totalorder 1, %s21
      %p150 = scmp.lt.s32.totalorder %s21, 3
      %p151 = pnand %p149, %p150
      %p152 = pneg %p151
      // Predicated region
      $region9: #{tpu_custom_call.1} parent=5 // pred_check
        _
      $region10: #{tpu_custom_call.1} parent=5 // pred_check_branch
        %154 = sbr.rel (%p151) target = $region12
      $region11: #{tpu_custom_call.1} parent=5 // pred_region
        %s155 = ssub.s32 %s21, 1
        // Predicated region
        $region13: #{tpu_custom_call.1} parent=11 // pred_check
          %p156 = pneg %p68
        $region14: #{tpu_custom_call.1} parent=11 // pred_check_branch
          %158 = sbr.rel (%p156) target = $region16
        $region15: #{tpu_custom_call.1} parent=11 // pred_region
          %s160 = ssub.s32 2048, 2048
          %161 = vsyncadd [#allocation6], %s160
          %s162 = sshll.u32 [#allocation5], 4
          %s163 = int_to_ptr.vmem [resolvable:$true] %s162
          %168 = dma.hbm_to_vmem [thread:$0]  %s1, 2048, %s163, [#allocation6], 64, 64, 4
        $region16: #{tpu_custom_call.1} parent=11 // pred_fallthru
          _
        // Predicated region
        $region17: #{tpu_custom_call.1} parent=11 // pred_check
          %p169 = pneg %p89
        $region18: #{tpu_custom_call.1} parent=11 // pred_check_branch
          %171 = sbr.rel (%p169) target = $region20
        $region19: #{tpu_custom_call.1} parent=11 // pred_region
          _
        $region20: #{tpu_custom_call.1} parent=11 // pred_fallthru
          _
      $region12: #{tpu_custom_call.1} parent=5 // pred_fallthru
        _
      %p172 = scmp.lt.s32.totalorder %s21, 2
      // Predicated region
      $region21: #{tpu_custom_call.1} parent=5 // pred_check
        %p173 = pneg %p172
      $region22: #{tpu_custom_call.1} parent=5 // pred_check_branch
        %175 = sbr.rel (%p173) target = $region24
      $region23: #{tpu_custom_call.1} parent=5 // pred_region
        // Predicated region
        $region25: #{tpu_custom_call.1} parent=23 // pred_check
          %p176 = pneg %p41
        $region26: #{tpu_custom_call.1} parent=23 // pred_check_branch
          %178 = sbr.rel (%p176) target = $region28
        $region27: #{tpu_custom_call.1} parent=23 // pred_region
          %s179 = sand.u32 %s31, 1
          %s180 = scalar_lea.sflag [#allocation3], %s179
          %s181 = sand.u32 %s31, 1
          %s182 = smul.addr %s181, 128
          %s183 = scalar_lea.vmem [#allocation2], %s182
          %s184 = smul.u32 16, %s21
          %s186 = ssub.s32 2048, 2048
          %187 = vsyncadd %s180, %s186
          %s188 = smul.addr %s184, 128
          %s189 = scalar_lea.hbm %s0, %s188
          %s190 = sshll.u32 %s183, 4
          %s191 = int_to_ptr.vmem [resolvable:$true] %s190
          %196 = dma.hbm_to_vmem [thread:$0]  %s189, 2048, %s191, %s180, 128, 128, 8
        $region28: #{tpu_custom_call.1} parent=23 // pred_fallthru
          _
      $region24: #{tpu_custom_call.1} parent=5 // pred_fallthru
        _
      %p197 = scmp.le.s32.totalorder 1, %s21
      %p198 = scmp.lt.s32.totalorder %s21, 3
      %p199 = pnand %p197, %p198
      %p200 = pneg %p199
      // Predicated region
      $region29: #{tpu_custom_call.1} parent=5 // pred_check
        _
      $region30: #{tpu_custom_call.1} parent=5 // pred_check_branch
        %202 = sbr.rel (%p199) target = $region32
      $region31: #{tpu_custom_call.1} parent=5 // pred_region
        %s203 = ssub.s32 %s21, 1
        %s204 = sand.u32 %s34, 1
        %s205 = scalar_lea.sflag [#allocation3], %s204
        %s206 = sand.u32 %s34, 1
        %s207 = smul.addr %s206, 128
        %s208 = scalar_lea.vmem [#allocation2], %s207
        // Predicated region
        $region33: #{tpu_custom_call.1} parent=31 // pred_check
          %p209 = pneg %p47
        $region34: #{tpu_custom_call.1} parent=31 // pred_check_branch
          %211 = sbr.rel (%p209) target = $region36
        $region35: #{tpu_custom_call.1} parent=31 // pred_region
          %212 = dma.done %s205, 2048
        $region36: #{tpu_custom_call.1} parent=31 // pred_fallthru
          _
        // Predicated region
        $region37: #{tpu_custom_call.1} parent=31 // pred_check
          %p213 = pneg %p68
        $region38: #{tpu_custom_call.1} parent=31 // pred_check_branch
          %215 = sbr.rel (%p213) target = $region40
        $region39: #{tpu_custom_call.1} parent=31 // pred_region
          %216 = dma.done [#allocation6], 2048
        $region40: #{tpu_custom_call.1} parent=31 // pred_fallthru
          _
        %s217 = sand.u32 %s34, 1
        %s218 = scalar_lea.sflag [#allocation3], %s217
        %s219 = sand.u32 %s34, 1
        %s220 = smul.addr %s219, 128
        %s221 = scalar_lea.vmem [#allocation2], %s220
        %p222 = pneg %p47
        %p223 = pneg %p44
        %p224 = pneg %p68
        %p225 = pneg %p65
        %p226 = pneg %p89
        %p227 = pneg %p86
        %p228 = pneg %p115
        %p229 = pneg %p112
        %s230 = sand.u32 %s102, 1
        %s231 = scalar_lea.sflag [#allocation4], %s230
        %s232 = sand.u32 %s102, 1
        %s233 = smul.addr %s232, 256
        %s234 = scalar_lea.vmem [#allocation7], %s233
        %p235 = pneg %p141
        %p236 = pneg %p138
        %s237 = sand.u32 %s128, 1
        %s238 = scalar_lea.sflag [#allocation9], %s237
        %s239 = sand.u32 %s128, 1
        %s240 = smul.addr %s239, 16
        %s241 = scalar_lea.vmem [#allocation8], %s240
        %s242 = smul.u32 16, %s26
        %s243 = smul.u32 16, %s26
        %v245 = vld [vmem:[%s208] sm:$0xff]
        %v246 = vld [vmem:[%s208 + $0x8] sm:$0xff]
        %v247 = vld [vmem:[%s208 + $0x10] sm:$0xff]
        %v248 = vld [vmem:[%s208 + $0x18] sm:$0xff]
        %v249 = vld [vmem:[%s208 + $0x20] sm:$0xff]
        %v250 = vld [vmem:[%s208 + $0x28] sm:$0xff]
        %v251 = vld [vmem:[%s208 + $0x30] sm:$0xff]
        %v252 = vld [vmem:[%s208 + $0x38] sm:$0xff]
        %v253 = vld [vmem:[%s208 + $0x40] sm:$0xff]
        %v254 = vld [vmem:[%s208 + $0x48] sm:$0xff]
        %v255 = vld [vmem:[%s208 + $0x50] sm:$0xff]
        %v256 = vld [vmem:[%s208 + $0x58] sm:$0xff]
        %v257 = vld [vmem:[%s208 + $0x60] sm:$0xff]
        %v258 = vld [vmem:[%s208 + $0x68] sm:$0xff]
        %v259 = vld [vmem:[%s208 + $0x70] sm:$0xff]
        %v260 = vld [vmem:[%s208 + $0x78] sm:$0xff]
        %v261 = vpack.c.bf16 %v246, %v245
        %v262 = vpack.c.bf16 %v248, %v247
        %v263 = vpack.c.bf16 %v250, %v249
        %v264 = vpack.c.bf16 %v252, %v251
        %v265 = vpack.c.bf16 %v254, %v253
        %v266 = vpack.c.bf16 %v256, %v255
        %v267 = vpack.c.bf16 %v258, %v257
        %v268 = vpack.c.bf16 %v260, %v259
        %v269 = vld [vmem:[#allocation5] sm:$0xf]
        %v270 = vld [vmem:[#allocation5 + $0x4] sm:$0xf]
        %v271 = vld [vmem:[#allocation5 + $0x8] sm:$0xf]
        %v272 = vld [vmem:[#allocation5 + $0xc] sm:$0xf]
        %v273 = vld [vmem:[#allocation5 + $0x10] sm:$0xf]
        %v274 = vld [vmem:[#allocation5 + $0x14] sm:$0xf]
        %v275 = vld [vmem:[#allocation5 + $0x18] sm:$0xf]
        %v276 = vld [vmem:[#allocation5 + $0x1c] sm:$0xf]
        %v277 = vld [vmem:[#allocation5 + $0x20] sm:$0xf]
        %v278 = vld [vmem:[#allocation5 + $0x24] sm:$0xf]
        %v279 = vld [vmem:[#allocation5 + $0x28] sm:$0xf]
        %v280 = vld [vmem:[#allocation5 + $0x2c] sm:$0xf]
        %v281 = vld [vmem:[#allocation5 + $0x30] sm:$0xf]
        %v282 = vld [vmem:[#allocation5 + $0x34] sm:$0xf]
        %v283 = vld [vmem:[#allocation5 + $0x38] sm:$0xf]
        %v284 = vld [vmem:[#allocation5 + $0x3c] sm:$0xf]
        %v285 = vld [vmem:[#allocation5 + $0x40] sm:$0xf]
        %v286 = vld [vmem:[#allocation5 + $0x44] sm:$0xf]
        %v287 = vld [vmem:[#allocation5 + $0x48] sm:$0xf]
        %v288 = vld [vmem:[#allocation5 + $0x4c] sm:$0xf]
        %v289 = vld [vmem:[#allocation5 + $0x50] sm:$0xf]
        %v290 = vld [vmem:[#allocation5 + $0x54] sm:$0xf]
        %v291 = vld [vmem:[#allocation5 + $0x58] sm:$0xf]
        %v292 = vld [vmem:[#allocation5 + $0x5c] sm:$0xf]
        %v293 = vld [vmem:[#allocation5 + $0x60] sm:$0xf]
        %v294 = vld [vmem:[#allocation5 + $0x64] sm:$0xf]
        %v295 = vld [vmem:[#allocation5 + $0x68] sm:$0xf]
        %v296 = vld [vmem:[#allocation5 + $0x6c] sm:$0xf]
        %v297 = vld [vmem:[#allocation5 + $0x70] sm:$0xf]
        %v298 = vld [vmem:[#allocation5 + $0x74] sm:$0xf]
        %v299 = vld [vmem:[#allocation5 + $0x78] sm:$0xf]
        %v300 = vld [vmem:[#allocation5 + $0x7c] sm:$0xf]
        %v301 = vld [vmem:[%s2] sm:$0x3]
        %v303 = vlaneseq
        %v304 = vshrl.u32 %v303, 7
        %v305 = vsub.s32 0, %v304
        %v306 = vrot.slane %v301, %v305
        %v307 = vlaneseq
        %v308 = vshrl.u32 %v307, 7
        %v309 = vsub.s32 1, %v308
        %v310 = vrot.slane %v301, %v309
        %v345 = vunpack.c.l.b16 %v269
        %v346 = vunpack.c.l.b16 %v270
        %v347 = vunpack.c.l.b16 %v271
        %v348 = vunpack.c.l.b16 %v272
        %v349 = vunpack.c.l.b16 %v273
        %v350 = vunpack.c.l.b16 %v274
        %v351 = vunpack.c.l.b16 %v275
        %v352 = vunpack.c.l.b16 %v276
        %v353 = vunpack.c.l.b16 %v277
        %v354 = vunpack.c.l.b16 %v278
        %v355 = vunpack.c.l.b16 %v279
        %v356 = vunpack.c.l.b16 %v280
        %v357 = vunpack.c.l.b16 %v281
        %v358 = vunpack.c.l.b16 %v282
        %v359 = vunpack.c.l.b16 %v283
        %v360 = vunpack.c.l.b16 %v284
        %v361 = vunpack.c.l.b16 %v285
        %v362 = vunpack.c.l.b16 %v286
        %v363 = vunpack.c.l.b16 %v287
        %v364 = vunpack.c.l.b16 %v288
        %v365 = vunpack.c.l.b16 %v289
        %v366 = vunpack.c.l.b16 %v290
        %v367 = vunpack.c.l.b16 %v291
        %v368 = vunpack.c.l.b16 %v292
        %v369 = vunpack.c.l.b16 %v293
        %v370 = vunpack.c.l.b16 %v294
        %v371 = vunpack.c.l.b16 %v295
        %v372 = vunpack.c.l.b16 %v296
        %v373 = vunpack.c.l.b16 %v297
        %v374 = vunpack.c.l.b16 %v298
        %v375 = vunpack.c.l.b16 %v299
        %v376 = vunpack.c.l.b16 %v300
        %v377 = vpack.c.b16 %v346, %v345
        %v378 = vpack.c.b16 %v348, %v347
        %v379 = vpack.c.b16 %v350, %v349
        %v380 = vpack.c.b16 %v352, %v351
        %v381 = vpack.c.b16 %v354, %v353
        %v382 = vpack.c.b16 %v356, %v355
        %v383 = vpack.c.b16 %v358, %v357
        %v384 = vpack.c.b16 %v360, %v359
        %v385 = vpack.c.b16 %v362, %v361
        %v386 = vpack.c.b16 %v364, %v363
        %v387 = vpack.c.b16 %v366, %v365
        %v388 = vpack.c.b16 %v368, %v367
        %v389 = vpack.c.b16 %v370, %v369
        %v390 = vpack.c.b16 %v372, %v371
        %v391 = vpack.c.b16 %v374, %v373
        %v392 = vpack.c.b16 %v376, %v375
        %409 = vmatprep.subr.bf16.mxu0 0
        %410 = vmatpush1.bf16.xpose.msra.mxu0 %v377
        %411 = vmatprep.subr.bf16.mxu0 0
        %412 = vmatpush1.bf16.xpose.msra.mxu0 %v378
        %413 = vmatprep.subr.bf16.mxu0 0
        %414 = vmatpush1.bf16.xpose.msra.mxu0 %v379
        %415 = vmatprep.subr.bf16.mxu0 0
        %416 = vmatpush1.bf16.xpose.msra.mxu0 %v380
        %417 = vmatprep.subr.bf16.mxu0 0
        %418 = vmatpush1.bf16.xpose.msra.mxu0 %v381
        %419 = vmatprep.subr.bf16.mxu0 0
        %420 = vmatpush1.bf16.xpose.msra.mxu0 %v382
        %421 = vmatprep.subr.bf16.mxu0 0
        %422 = vmatpush1.bf16.xpose.msra.mxu0 %v383
        %423 = vmatprep.subr.bf16.mxu0 0
        %424 = vmatpush1.bf16.xpose.msra.mxu0 %v384
        %425 = vmatprep.subr.bf16.mxu0 0
        %426 = vmatpush1.bf16.xpose.msra.mxu0 %v385
        %427 = vmatprep.subr.bf16.mxu0 0
        %428 = vmatpush1.bf16.xpose.msra.mxu0 %v386
        %429 = vmatprep.subr.bf16.mxu0 0
        %430 = vmatpush1.bf16.xpose.msra.mxu0 %v387
        %431 = vmatprep.subr.bf16.mxu0 0
        %432 = vmatpush1.bf16.xpose.msra.mxu0 %v388
        %433 = vmatprep.subr.bf16.mxu0 0
        %434 = vmatpush1.bf16.xpose.msra.mxu0 %v389
        %435 = vmatprep.subr.bf16.mxu0 0
        %436 = vmatpush1.bf16.xpose.msra.mxu0 %v390
        %437 = vmatprep.subr.bf16.mxu0 0
        %438 = vmatpush1.bf16.xpose.msra.mxu0 %v391
        %439 = vmatprep.subr.bf16.mxu0 0
        %440 = vmatpush1.bf16.xpose.msra.mxu0 %v392
        %441 = vmatprep.mubr.bf16.mxu0 0
        %442 = vmatmul.mubr.bf16.gmra.mrb[0].mxu0 %v261
        %v443 = vpop.f32.mrb[0].mxu0
        %v444 = vadd.f32 %v306, %v443
        %v445 = vpop.f32.mrb[0].mxu0
        %v446 = vadd.f32 %v310, %v445
        %v447 = vpop.f32.mrb[0].mxu0
        %v448 = vadd.f32 %v306, %v447
        %v449 = vpop.f32.mrb[0].mxu0
        %v450 = vadd.f32 %v310, %v449
        %451 = vmatprep.mubr.bf16.mxu0 0
        %452 = vmatmul.mubr.bf16.gmra.mrb[0].mxu0 %v262
        %v453 = vpop.f32.mrb[0].mxu0
        %v454 = vadd.f32 %v306, %v453
        %v455 = vpop.f32.mrb[0].mxu0
        %v456 = vadd.f32 %v310, %v455
        %v457 = vpop.f32.mrb[0].mxu0
        %v458 = vadd.f32 %v306, %v457
        %v459 = vpop.f32.mrb[0].mxu0
        %v460 = vadd.f32 %v310, %v459
        %461 = vmatprep.mubr.bf16.mxu0 0
        %462 = vmatmul.mubr.bf16.gmra.mrb[0].mxu0 %v263
        %v463 = vpop.f32.mrb[0].mxu0
        %v464 = vadd.f32 %v306, %v463
        %v465 = vpop.f32.mrb[0].mxu0
        %v466 = vadd.f32 %v310, %v465
        %v467 = vpop.f32.mrb[0].mxu0
        %v468 = vadd.f32 %v306, %v467
        %v469 = vpop.f32.mrb[0].mxu0
        %v470 = vadd.f32 %v310, %v469
        %471 = vmatprep.mubr.bf16.mxu0 0
        %472 = vmatmul.mubr.bf16.gmra.mrb[0].mxu0 %v264
        %v473 = vpop.f32.mrb[0].mxu0
        %v474 = vadd.f32 %v306, %v473
        %v475 = vpop.f32.mrb[0].mxu0
        %v476 = vadd.f32 %v310, %v475
        %v477 = vpop.f32.mrb[0].mxu0
        %v478 = vadd.f32 %v306, %v477
        %v479 = vpop.f32.mrb[0].mxu0
        %v480 = vadd.f32 %v310, %v479
        %481 = vmatprep.mubr.bf16.mxu0 0
        %482 = vmatmul.mubr.bf16.gmra.mrb[0].mxu0 %v265
        %v483 = vpop.f32.mrb[0].mxu0
        %v484 = vadd.f32 %v306, %v483
        %v485 = vpop.f32.mrb[0].mxu0
        %v486 = vadd.f32 %v310, %v485
        %v487 = vpop.f32.mrb[0].mxu0
        %v488 = vadd.f32 %v306, %v487
        %v489 = vpop.f32.mrb[0].mxu0
        %v490 = vadd.f32 %v310, %v489
        %491 = vmatprep.mubr.bf16.mxu0 0
        %492 = vmatmul.mubr.bf16.gmra.mrb[0].mxu0 %v266
        %v493 = vpop.f32.mrb[0].mxu0
        %v494 = vadd.f32 %v306, %v493
        %v495 = vpop.f32.mrb[0].mxu0
        %v496 = vadd.f32 %v310, %v495
        %v497 = vpop.f32.mrb[0].mxu0
        %v498 = vadd.f32 %v306, %v497
        %v499 = vpop.f32.mrb[0].mxu0
        %v500 = vadd.f32 %v310, %v499
        %501 = vmatprep.mubr.bf16.mxu0 0
        %502 = vmatmul.mubr.bf16.gmra.mrb[0].mxu0 %v267
        %v503 = vpop.f32.mrb[0].mxu0
        %v504 = vadd.f32 %v306, %v503
        %v505 = vpop.f32.mrb[0].mxu0
        %v506 = vadd.f32 %v310, %v505
        %v507 = vpop.f32.mrb[0].mxu0
        %v508 = vadd.f32 %v306, %v507
        %v509 = vpop.f32.mrb[0].mxu0
        %v510 = vadd.f32 %v310, %v509
        %511 = vmatprep.mubr.bf16.mxu0 0
        %512 = vmatmul.mubr.bf16.gmra.mrb[0].mxu0 %v268
        %v513 = vpop.f32.mrb[0].mxu0
        %v514 = vadd.f32 %v306, %v513
        %v515 = vpop.f32.mrb[0].mxu0
        %v516 = vadd.f32 %v310, %v515
        %v517 = vpop.f32.mrb[0].mxu0
        %v518 = vadd.f32 %v306, %v517
        %v519 = vpop.f32.mrb[0].mxu0
        %v520 = vadd.f32 %v310, %v519
        %521 = vdwg.mxu0
        %522 = vst [vmem:[%s234] sm:$0xff] %v444
        %523 = vst [vmem:[%s234 + $0x8] sm:$0xff] %v446
        %524 = vst [vmem:[%s234 + $0x10] sm:$0xff] %v448
        %525 = vst [vmem:[%s234 + $0x18] sm:$0xff] %v450
        %526 = vst [vmem:[%s234 + $0x20] sm:$0xff] %v454
        %527 = vst [vmem:[%s234 + $0x28] sm:$0xff] %v456
        %528 = vst [vmem:[%s234 + $0x30] sm:$0xff] %v458
        %529 = vst [vmem:[%s234 + $0x38] sm:$0xff] %v460
        %530 = vst [vmem:[%s234 + $0x40] sm:$0xff] %v464
        %531 = vst [vmem:[%s234 + $0x48] sm:$0xff] %v466
        %532 = vst [vmem:[%s234 + $0x50] sm:$0xff] %v468
        %533 = vst [vmem:[%s234 + $0x58] sm:$0xff] %v470
        %534 = vst [vmem:[%s234 + $0x60] sm:$0xff] %v474
        %535 = vst [vmem:[%s234 + $0x68] sm:$0xff] %v476
        %536 = vst [vmem:[%s234 + $0x70] sm:$0xff] %v478
        %537 = vst [vmem:[%s234 + $0x78] sm:$0xff] %v480
        %538 = vst [vmem:[%s234 + $0x80] sm:$0xff] %v484
        %539 = vst [vmem:[%s234 + $0x88] sm:$0xff] %v486
        %540 = vst [vmem:[%s234 + $0x90] sm:$0xff] %v488
        %541 = vst [vmem:[%s234 + $0x98] sm:$0xff] %v490
        %542 = vst [vmem:[%s234 + $0xa0] sm:$0xff] %v494
        %543 = vst [vmem:[%s234 + $0xa8] sm:$0xff] %v496
        %544 = vst [vmem:[%s234 + $0xb0] sm:$0xff] %v498
        %545 = vst [vmem:[%s234 + $0xb8] sm:$0xff] %v500
        %546 = vst [vmem:[%s234 + $0xc0] sm:$0xff] %v504
        %547 = vst [vmem:[%s234 + $0xc8] sm:$0xff] %v506
        %548 = vst [vmem:[%s234 + $0xd0] sm:$0xff] %v508
        %549 = vst [vmem:[%s234 + $0xd8] sm:$0xff] %v510
        %550 = vst [vmem:[%s234 + $0xe0] sm:$0xff] %v514
        %551 = vst [vmem:[%s234 + $0xe8] sm:$0xff] %v516
        %552 = vst [vmem:[%s234 + $0xf0] sm:$0xff] %v518
        %553 = vst [vmem:[%s234 + $0xf8] sm:$0xff] %v520
        %v554 = vadd.f32 %v444, %v448
        %v555 = vadd.f32 %v554, %v454
        %v556 = vadd.f32 %v555, %v458
        %v557 = vadd.f32 %v556, %v464
        %v558 = vadd.f32 %v557, %v468
        %v559 = vadd.f32 %v558, %v474
        %v560 = vadd.f32 %v559, %v478
        %v561 = vadd.f32 %v560, %v484
        %v562 = vadd.f32 %v561, %v488
        %v563 = vadd.f32 %v562, %v494
        %v564 = vadd.f32 %v563, %v498
        %v565 = vadd.f32 %v564, %v504
        %v566 = vadd.f32 %v565, %v508
        %v567 = vadd.f32 %v566, %v514
        %v568 = vadd.f32 %v567, %v518
        %v569 = vrot.slane %v568, 4
        %v570 = vadd.f32 %v568, %v569
        %v571 = vrot.slane %v570, 2
        %v572 = vadd.f32 %v570, %v571
        %v573 = vrot.slane %v572, 1
        %v574 = vadd.f32 %v572, %v573
        %v575 = vadd.f32 %v446, %v450
        %v576 = vadd.f32 %v575, %v456
        %v577 = vadd.f32 %v576, %v460
        %v578 = vadd.f32 %v577, %v466
        %v579 = vadd.f32 %v578, %v470
        %v580 = vadd.f32 %v579, %v476
        %v581 = vadd.f32 %v580, %v480
        %v582 = vadd.f32 %v581, %v486
        %v583 = vadd.f32 %v582, %v490
        %v584 = vadd.f32 %v583, %v496
        %v585 = vadd.f32 %v584, %v500
        %v586 = vadd.f32 %v585, %v506
        %v587 = vadd.f32 %v586, %v510
        %v588 = vadd.f32 %v587, %v516
        %v589 = vadd.f32 %v588, %v520
        %v590 = vrot.slane %v589, 4
        %v591 = vadd.f32 %v589, %v590
        %v592 = vrot.slane %v591, 2
        %v593 = vadd.f32 %v591, %v592
        %v594 = vrot.slane %v593, 1
        %v595 = vadd.f32 %v593, %v594
        %v596 = vmul.f32 %v444, %v444
        %v597 = vmul.f32 %v446, %v446
        %v598 = vmul.f32 %v448, %v448
        %v599 = vmul.f32 %v450, %v450
        %v600 = vmul.f32 %v454, %v454
        %v601 = vmul.f32 %v456, %v456
        %v602 = vmul.f32 %v458, %v458
        %v603 = vmul.f32 %v460, %v460
        %v604 = vmul.f32 %v464, %v464
        %v605 = vmul.f32 %v466, %v466
        %v606 = vmul.f32 %v468, %v468
        %v607 = vmul.f32 %v470, %v470
        %v608 = vmul.f32 %v474, %v474
        %v609 = vmul.f32 %v476, %v476
        %v610 = vmul.f32 %v478, %v478
        %v611 = vmul.f32 %v480, %v480
        %v612 = vmul.f32 %v484, %v484
        %v613 = vmul.f32 %v486, %v486
        %v614 = vmul.f32 %v488, %v488
        %v615 = vmul.f32 %v490, %v490
        %v616 = vmul.f32 %v494, %v494
        %v617 = vmul.f32 %v496, %v496
        %v618 = vmul.f32 %v498, %v498
        %v619 = vmul.f32 %v500, %v500
        %v620 = vmul.f32 %v504, %v504
        %v621 = vmul.f32 %v506, %v506
        %v622 = vmul.f32 %v508, %v508
        %v623 = vmul.f32 %v510, %v510
        %v624 = vmul.f32 %v514, %v514
        %v625 = vmul.f32 %v516, %v516
        %v626 = vmul.f32 %v518, %v518
        %v627 = vmul.f32 %v520, %v520
        %v628 = vadd.f32 %v596, %v598
        %v629 = vadd.f32 %v628, %v600
        %v630 = vadd.f32 %v629, %v602
        %v631 = vadd.f32 %v630, %v604
        %v632 = vadd.f32 %v631, %v606
        %v633 = vadd.f32 %v632, %v608
        %v634 = vadd.f32 %v633, %v610
        %v635 = vadd.f32 %v634, %v612
        %v636 = vadd.f32 %v635, %v614
        %v637 = vadd.f32 %v636, %v616
        %v638 = vadd.f32 %v637, %v618
        %v639 = vadd.f32 %v638, %v620
        %v640 = vadd.f32 %v639, %v622
        %v641 = vadd.f32 %v640, %v624
        %v642 = vadd.f32 %v641, %v626
        %v643 = vrot.slane %v642, 4
        %v644 = vadd.f32 %v642, %v643
        %v645 = vrot.slane %v644, 2
        %v646 = vadd.f32 %v644, %v645
        %v647 = vrot.slane %v646, 1
        %v648 = vadd.f32 %v646, %v647
        %v649 = vadd.f32 %v597, %v599
        %v650 = vadd.f32 %v649, %v601
        %v651 = vadd.f32 %v650, %v603
        %v652 = vadd.f32 %v651, %v605
        %v653 = vadd.f32 %v652, %v607
        %v654 = vadd.f32 %v653, %v609
        %v655 = vadd.f32 %v654, %v611
        %v656 = vadd.f32 %v655, %v613
        %v657 = vadd.f32 %v656, %v615
        %v658 = vadd.f32 %v657, %v617
        %v659 = vadd.f32 %v658, %v619
        %v660 = vadd.f32 %v659, %v621
        %v661 = vadd.f32 %v660, %v623
        %v662 = vadd.f32 %v661, %v625
        %v663 = vadd.f32 %v662, %v627
        %v664 = vrot.slane %v663, 4
        %v665 = vadd.f32 %v663, %v664
        %v666 = vrot.slane %v665, 2
        %v667 = vadd.f32 %v665, %v666
        %v668 = vrot.slane %v667, 1
        %v669 = vadd.f32 %v667, %v668
        %v670 = vlaneseq
        %v671 = vshrl.u32 %v670, 7
        %vm672 = vcmp.eq.s32.totalorder %v671, 0
        %vm673 = vcmp.eq.s32.totalorder %v671, 1
        %v674 = vsel %vm673, %v648, 0.0
        %v675 = vsel %vm673, %v669, 0.0
        %v676 = vsel %vm672, %v574, %v674
        %v677 = vsel %vm672, %v595, %v675
        %678 = vst [vmem:[%s241] sm:$0xff] %v676
        %679 = vst [vmem:[%s241 + $0x8] sm:$0xff] %v677
        %s680 = sand.u32 %s102, 1
        %s681 = scalar_lea.sflag [#allocation4], %s680
        %s682 = sand.u32 %s102, 1
        %s683 = smul.addr %s682, 256
        %s684 = scalar_lea.vmem [#allocation7], %s683
        %s685 = sand.u32 %s128, 1
        %s686 = scalar_lea.sflag [#allocation9], %s685
        %s687 = sand.u32 %s128, 1
        %s688 = smul.addr %s687, 16
        %s689 = scalar_lea.vmem [#allocation8], %s688
        // Predicated region
        $region41: #{tpu_custom_call.1} parent=31 // pred_check
          %p690 = pneg %p112
        $region42: #{tpu_custom_call.1} parent=31 // pred_check_branch
          %692 = sbr.rel (%p690) target = $region44
        $region43: #{tpu_custom_call.1} parent=31 // pred_region
          %s693 = smul.u32 16, %s26
          %s695 = ssub.s32 4096, 4096
          %696 = vsyncadd %s681, %s695
          %s697 = smul.addr %s693, 2
          %s698 = smul.addr %s697, 128
          %s699 = scalar_lea.hbm %s3, %s698
          %s700 = sshll.u32 %s684, 4
          %s701 = int_to_ptr.vmem [resolvable:$true] %s700
          %706 = dma.vmem_to_hbm [thread:$0]  %s701, 4096, %s699, %s681, 256, 256, 16
        $region44: #{tpu_custom_call.1} parent=31 // pred_fallthru
          _
        // Predicated region
        $region45: #{tpu_custom_call.1} parent=31 // pred_check
          %p707 = pneg %p138
        $region46: #{tpu_custom_call.1} parent=31 // pred_check_branch
          %709 = sbr.rel (%p707) target = $region48
        $region47: #{tpu_custom_call.1} parent=31 // pred_region
          %s711 = ssub.s32 256, 256
          %712 = vsyncadd %s686, %s711
          %s713 = smul.addr %s26, 2
          %s714 = smul.addr %s713, 128
          %s715 = scalar_lea.hbm %s4, %s714
          %s717 = sshll.u32 %s689, 4
          %s718 = int_to_ptr.vmem [resolvable:$true] %s717
          %720 = dma.vmem_to_hbm [thread:$0]  %s718, 256, %s715, %s686
        $region48: #{tpu_custom_call.1} parent=31 // pred_fallthru
          _
      $region32: #{tpu_custom_call.1} parent=5 // pred_fallthru
        _
      %p721 = scmp.le.s32.totalorder 2, %s21
      // Predicated region
      $region49: #{tpu_custom_call.1} parent=5 // pred_check
        %p722 = pneg %p721
      $region50: #{tpu_custom_call.1} parent=5 // pred_check_branch
        %724 = sbr.rel (%p722) target = $region52
      $region51: #{tpu_custom_call.1} parent=5 // pred_region
        %s725 = ssub.s32 %s21, 2
        // Predicated region
        $region53: #{tpu_custom_call.1} parent=51 // pred_check
          %p726 = pneg %p118
        $region54: #{tpu_custom_call.1} parent=51 // pred_check_branch
          %728 = sbr.rel (%p726) target = $region56
        $region55: #{tpu_custom_call.1} parent=51 // pred_region
          %s729 = sand.u32 %s103, 1
          %s730 = scalar_lea.sflag [#allocation4], %s729
          %s731 = sand.u32 %s103, 1
          %s732 = smul.addr %s731, 256
          %s733 = scalar_lea.vmem [#allocation7], %s732
          %734 = dma.done %s730, 4096
        $region56: #{tpu_custom_call.1} parent=51 // pred_fallthru
          _
        // Predicated region
        $region57: #{tpu_custom_call.1} parent=51 // pred_check
          %p735 = pneg %p144
        $region58: #{tpu_custom_call.1} parent=51 // pred_check_branch
          %737 = sbr.rel (%p735) target = $region60
        $region59: #{tpu_custom_call.1} parent=51 // pred_region
          %s738 = sand.u32 %s129, 1
          %s739 = scalar_lea.sflag [#allocation9], %s738
          %s740 = sand.u32 %s129, 1
          %s741 = smul.addr %s740, 16
          %s742 = scalar_lea.vmem [#allocation8], %s741
          %743 = dma.done %s739, 256
        $region60: #{tpu_custom_call.1} parent=51 // pred_fallthru
          _
      $region52: #{tpu_custom_call.1} parent=5 // pred_fallthru
        _
    $region6: #{tpu_custom_call.1} parent=1 // loop_footer
      %s25 = sadd.s32 1, %s21
    $region7: #{tpu_custom_call.1} parent=1 // loop_footer_branch
      %20 = sbr.rel target = $region3
    $region8: #{tpu_custom_call.1} parent=1 // loop_exit
      _
    %744 = vsyncpa [#allocation3], 1
    %s745 = scalar_lea.sflag [#allocation3], 1
    %746 = vsyncpa %s745, 1
    %747 = vsyncpa [#allocation6], 1
    %748 = vsyncpa [#allocation4], 1
    %s749 = scalar_lea.sflag [#allocation4], 1
    %750 = vsyncpa %s749, 1
    %751 = vsyncpa [#allocation9], 1
    %s752 = scalar_lea.sflag [#allocation9], 1
    %753 = vsyncpa %s752, 1

</llo_original>
